<compile_context>
chip_gen: v5e
topology: v5e:2x2
jax: 0.10.0
libtpu: 0.0.40
codegen_flags: <defaults>
</compile_context>

<pallas_src>
import numpy as np
import jax
import jax.numpy as jnp
from jax.experimental import pallas as pl
from jax.experimental.pallas import tpu as pltpu


# -----------------------------------------------------------------------------
# Faithful port of the PyTorch helper (including its H/W ordering quirk, which
# is harmless for the symmetric kernels I3D uses).
# -----------------------------------------------------------------------------
def get_padding_shape(filter_shape, stride):
    def _pad_top_bottom(filter_dim, stride_val):
        pad_along = max(filter_dim - stride_val, 0)
        pad_top = pad_along // 2
        pad_bottom = pad_along - pad_top
        return (pad_top, pad_bottom)

    padding_shape = []
    for filter_dim, stride_val in zip(filter_shape, stride):
        pad_top, pad_bottom = _pad_top_bottom(filter_dim, stride_val)
        padding_shape.append(pad_top)
        padding_shape.append(pad_bottom)
    depth_top = padding_shape.pop(0)
    depth_bottom = padding_shape.pop(0)
    padding_shape.append(depth_top)
    padding_shape.append(depth_bottom)
    return tuple(padding_shape)


def _pool_out_size(length, k, s):
    """PyTorch MaxPool output size with ceil_mode=True and pool-padding=0."""
    out = -(-(length - k) // s) + 1
    if (out - 1) * s >= length:  # PyTorch drops a window starting past the input
        out -= 1
    return int(out)


def _lowest(dtype):
    dtype = jnp.dtype(dtype)
    if jnp.issubdtype(dtype, jnp.floating):
        return jnp.finfo(dtype).min
    return jnp.iinfo(dtype).min


def _ds(start, size, stride=1):
    return pl.ds(start, size, stride) if stride != 1 else pl.ds(start, size)


# -----------------------------------------------------------------------------
# Kernel factory (all bookkeeping is static / trace-time).
# -----------------------------------------------------------------------------
def _make_kernel(raw_shape, ext_shape, out_blk_shape, ksize, stride,
                 front_pads, back_pads, overhang, needs_ext, do_t, do_h, dtype):
    T, H, W = raw_shape
    Te, He, We = ext_shape
    To, Ho, Wspan = out_blk_shape
    kt, kh, kw = ksize
    st, sh, sw = stride
    pt0, ph0, pw0 = front_pads
    pt1, ph1, pw1 = back_pads
    ot, oh, ow = overhang
    needs_tmp = do_t and do_h
    neg = _lowest(dtype)

    def fill_ext(x_ref, ext_ref):
        # "SAME" zero borders first.  Zeros DO participate in the max, matching
        # the PyTorch module's ConstantPad3d(0) + MaxPool3d semantics.
        if pt0:
            ext_ref[_ds(0, pt0), :, :] = jnp.full((pt0, He, We), 0, dtype)
        if pt1:
            ext_ref[_ds(pt0 + T, pt1), :, :] = jnp.full((pt1, He, We), 0, dtype)
        if ph0:
            ext_ref[:, _ds(0, ph0), :] = jnp.full((Te, ph0, We), 0, dtype)
        if ph1:
            ext_ref[:, _ds(ph0 + H, ph1), :] = jnp.full((Te, ph1, We), 0, dtype)
        if pw0:
            ext_ref[:, :, _ds(0, pw0)] = jnp.full((Te, He, pw0), 0, dtype)
        if pw1:
            ext_ref[:, :, _ds(pw0 + W, pw1)] = jnp.full((Te, He, pw1), 0, dtype)
        # ceil-mode overhang acts as -inf (ignored by max); written last so that
        # pad/overhang corners also end up ignored.
        if ot:
            ext_ref[_ds(Te - ot, ot), :, :] = jnp.full((ot, He, We), neg, dtype)
        if oh:
            ext_ref[:, _ds(He - oh, oh), :] = jnp.full((Te, oh, We), neg, dtype)
        if ow:
            ext_ref[:, :, _ds(We - ow, ow)] = jnp.full((Te, He, ow), neg, dtype)
        # raw interior (disjoint from all border slabs)
        tc, hc, wc = min(T, Te - pt0), min(H, He - ph0), min(W, We - pw0)
        ext_ref[_ds(pt0, tc), _ds(ph0, hc), _ds(pw0, wc)] = \
            x_ref[_ds(0, tc), _ds(0, hc), _ds(0, wc)]

    def pool(src, o_ref, a_ref):
        # Separable max.  Strided reads only on outer (T) / sublane (H) dims of
        # refs; the lane dim (W) is reduced with unit-stride shifted slices.
        if do_t and do_h:
            acc = src[_ds(0, To, st), :, :]
            for dt in range(1, kt):
                acc = jnp.maximum(acc, src[_ds(dt, To, st), :, :])
            a_ref[...] = acc
            h_src = a_ref
        elif do_h:
            h_src = src

        if do_h:
            b = h_src[:, _ds(0, Ho, sh), :]
            for dh in range(1, kh):
                b = jnp.maximum(b, h_src[:, _ds(dh, Ho, sh), :])
        elif do_t:
            b = src[_ds(0, To, st), :, :]
            for dt in range(1, kt):
                b = jnp.maximum(b, src[_ds(dt, To, st), :, :])
        else:
            b = src[...]

        # W sliding max (un-decimated; lane-dense store of width Wspan).
        c = b[:, :, 0:Wspan]
        for dw in range(1, kw):
            c = jnp.maximum(c, b[:, :, dw:dw + Wspan])
        o_ref[...] = c

    if needs_ext and needs_tmp:
        def kernel(x_ref, o_ref, ext_ref, a_ref):
            fill_ext(x_ref, ext_ref)
            pool(ext_ref, o_ref, a_ref)
    elif needs_ext:
        def kernel(x_ref, o_ref, ext_ref):
            fill_ext(x_ref, ext_ref)
            pool(ext_ref, o_ref, None)
    elif needs_tmp:
        def kernel(x_ref, o_ref, a_ref):
            pool(x_ref, o_ref, a_ref)
    else:
        def kernel(x_ref, o_ref):
            pool(x_ref, o_ref, None)
    return kernel


# -----------------------------------------------------------------------------
# Public wrapper: NCDHW in, NCDHW out (PyTorch layout).
# -----------------------------------------------------------------------------
def maxpool3d_tf_padding(x, kernel_size, stride=None, padding='SAME'):
    if stride is None:
        stride = kernel_size
    kt, kh, kw = kernel_size
    st, sh, sw = stride
    N, C, T, H, W = x.shape

    if padding == 'SAME':
        p = get_padding_shape(kernel_size, stride)
        # torch.nn.ConstantPad3d 6-tuple order: (W_l, W_r, H_t, H_b, D_front, D_back)
        pw0, pw1, ph0, ph1, pt0, pt1 = p
    else:
        pw0 = pw1 = ph0 = ph1 = pt0 = pt1 = 0

    Tp, Hp, Wp = T + pt0 + pt1, H + ph0 + ph1, W + pw0 + pw1
    To = _pool_out_size(Tp, kt, st)
    Ho = _pool_out_size(Hp, kh, sh)
    Wo = _pool_out_size(Wp, kw, sw)
    # window-covered ("extended") extents; overhang beyond the zero-padded input
    # is ignored by the max (ceil_mode), emulated with dtype-min in the kernel.
    Te, He, We = st * (To - 1) + kt, sh * (Ho - 1) + kh, sw * (Wo - 1) + kw
    ot, oh, ow = max(Te - Tp, 0), max(He - Hp, 0), max(We - Wp, 0)
    Wspan = sw * (Wo - 1) + 1  # W kept un-decimated inside the kernel (lane-dense)

    dtype = x.dtype
    needs_ext = any(v > 0 for v in (pt0, pt1, ph0, ph1, pw0, pw1, ot, oh, ow))
    do_t = not (kt == 1 and st == 1)
    do_h = not (kh == 1 and sh == 1)
    needs_tmp = do_t and do_h

    kernel = _make_kernel((T, H, W), (Te, He, We), (To, Ho, Wspan),
                          tuple(kernel_size), tuple(stride),
                          (pt0, ph0, pw0), (pt1, ph1, pw1), (ot, oh, ow),
                          needs_ext, do_t, do_h, dtype)

    scratch_shapes = []
    if needs_ext:
        scratch_shapes.append(pltpu.VMEM((Te, He, We), dtype))
    if needs_tmp:
        scratch_shapes.append(pltpu.VMEM((To, He, We), dtype))

    itemsize = jnp.dtype(dtype).itemsize
    vmem_est = (2 * (T * H * W + To * Ho * Wspan)
                + (Te * He * We if needs_ext else 0)
                + (To * He * We if needs_tmp else 0)
                + 2 * To * Ho * We) * itemsize
    cp_kwargs = dict(dimension_semantics=("parallel", "parallel"))
    if vmem_est > 12 * 1024 * 1024:
        # TODO(synk): very large per-channel slabs would need halo-aware T tiling
        # (esp. on v7x's 64 MiB VMEM); here we only raise the scoped-VMEM limit.
        cp_kwargs["vmem_limit_bytes"] = int(min(vmem_est * 3 // 2,
                                                96 * 1024 * 1024))

    out_full = pl.pallas_call(
        kernel,
        out_shape=jax.ShapeDtypeStruct((N, C, To, Ho, Wspan), dtype),
        grid_spec=pltpu.PrefetchScalarGridSpec(
            num_scalar_prefetch=0,
            grid=(N, C),
            in_specs=[pl.BlockSpec((None, None, T, H, W),
                                   lambda n, c: (n, c, 0, 0, 0))],
            out_specs=pl.BlockSpec((None, None, To, Ho, Wspan),
                                   lambda n, c: (n, c, 0, 0, 0)),
            scratch_shapes=scratch_shapes,
        ),
        compiler_params=pltpu.CompilerParams(**cp_kwargs),
        cost_estimate=pl.CostEstimate(
            flops=int(N * C * To * Ho * Wo * kt * kh * kw),
            transcendentals=0,
            bytes_accessed=int((x.size + N * C * To * Ho * Wspan) * itemsize),
        ),
    )(x)

    # stride-sw decimation along W: one tiny XLA slice on the small output
    # instead of strided lane reads inside the kernel.
    if sw > 1:
        return out_full[:, :, :, :, ::sw]
    return out_full


# -----------------------------------------------------------------------------
# Independent NumPy reference: explicit ConstantPad3d(0) + ceil-mode window max.
# -----------------------------------------------------------------------------
def _reference_naive(x, kernel_size, stride, padding='SAME'):
    kt, kh, kw = kernel_size
    st, sh, sw = stride
    if padding == 'SAME':
        p = get_padding_shape(kernel_size, stride)
        pad = ((0, 0), (0, 0), (p[4], p[5]), (p[2], p[3]), (p[0], p[1]))
    else:
        pad = ((0, 0),) * 5
    xp = np.pad(np.asarray(x), pad, mode='constant', constant_values=0.0)
    N, C, Tp, Hp, Wp = xp.shape
    To = _pool_out_size(Tp, kt, st)
    Ho = _pool_out_size(Hp, kh, sh)
    Wo = _pool_out_size(Wp, kw, sw)
    out = np.empty((N, C, To, Ho, Wo), dtype=xp.dtype)
    for t in range(To):
        for h in range(Ho):
            for w in range(Wo):
                win = xp[:, :, st * t:st * t + kt,
                            sh * h:sh * h + kh,
                            sw * w:sw * w + kw]     # numpy clips the overhang
                out[:, :, t, h, w] = win.max(axis=(2, 3, 4))
    return out


if __name__ == "__main__":
    key = jax.random.PRNGKey(0)
    N, C, T, H, W = 2, 4, 8, 16, 16
    x = jax.random.normal(key, (N, C, T, H, W), dtype=jnp.float32)

    # Typical I3D spatial pool: kernel (1,3,3), stride (1,2,2), SAME
    out = jax.block_until_ready(maxpool3d_tf_padding(x, (1, 3, 3), (1, 2, 2)))
    ref = _reference_naive(x, (1, 3, 3), (1, 2, 2))
    assert out.shape == ref.shape == (N, C, 8, 8, 8), (out.shape, ref.shape)
    assert np.allclose(np.asarray(out), ref, atol=1e-6)

    # Temporal + spatial pool: kernel (2,2,2), stride (2,2,2)
    out2 = jax.block_until_ready(maxpool3d_tf_padding(x, (2, 2, 2), (2, 2, 2)))
    ref2 = _reference_naive(x, (2, 2, 2), (2, 2, 2))
    assert out2.shape == ref2.shape == (N, C, 4, 8, 8), (out2.shape, ref2.shape)
    assert np.allclose(np.asarray(out2), ref2, atol=1e-6)

    # Exercises all three separable passes + in-kernel SAME padding + tmp scratch
    out3 = jax.block_until_ready(maxpool3d_tf_padding(x, (3, 3, 3), (2, 2, 2)))
    ref3 = _reference_naive(x, (3, 3, 3), (2, 2, 2))
    assert out3.shape == ref3.shape, (out3.shape, ref3.shape)
    assert np.allclose(np.asarray(out3), ref3, atol=1e-6)

    print("KERNEL_OK")
</pallas_src>

<mosaic_0001>
module attributes {stable_mosaic.version = 11 : i64} {
  func.func @kernel(%arg0: i32, %arg1: i32, %arg2: memref<1x1x8x16x16xf32, #tpu.memory_space<vmem>>, %arg3: memref<1x1x8x8x15xf32, #tpu.memory_space<vmem>>, %arg4: memref<8x17x17xf32, #tpu.memory_space<vmem>>) attributes {dimension_semantics = [#tpu.dimension_semantics<parallel>, #tpu.dimension_semantics<parallel>], iteration_bounds = array<i64: 2, 4>, scalar_prefetch = 0 : i64, scratch_operands = 1 : i64, tpu.core_type = #tpu.core_type<tc>, window_params = [{transform_indices = @transform_0, window_bounds = array<i64: 1, 1, 8, 16, 16>}, {transform_indices = @transform_1, window_bounds = array<i64: 1, 1, 8, 8, 15>}]} {
    %cst = arith.constant 0.000000e+00 : f32
    %0 = vector.broadcast %cst : f32 to vector<8x1x17xf32>
    %c0 = arith.constant 0 : index
    %c16 = arith.constant 16 : index
    %c0_0 = arith.constant 0 : index
    %1 = vector.load %arg4[%c0, %c16, %c0_0] : memref<8x17x17xf32, #tpu.memory_space<vmem>>, vector<8x1x17xf32>
    tpu.vector_store %arg4[%c0, %c16, %c0_0], %0 {strides = array<i32>} : memref<8x17x17xf32, #tpu.memory_space<vmem>>, vector<8x1x17xf32>,
    %cst_1 = arith.constant 0.000000e+00 : f32
    %2 = vector.broadcast %cst_1 : f32 to vector<8x17x1xf32>
    %c0_2 = arith.constant 0 : index
    %c0_3 = arith.constant 0 : index
    %c16_4 = arith.constant 16 : index
    %3 = vector.load %arg4[%c0_2, %c0_3, %c16_4] : memref<8x17x17xf32, #tpu.memory_space<vmem>>, vector<8x17x1xf32>
    tpu.vector_store %arg4[%c0_2, %c0_3, %c16_4], %2 {strides = array<i32>} : memref<8x17x17xf32, #tpu.memory_space<vmem>>, vector<8x17x1xf32>,
    %c0_5 = arith.constant 0 : index
    %c0_6 = arith.constant 0 : index
    %c0_7 = arith.constant 0 : index
    %c0_8 = arith.constant 0 : index
    %c0_9 = arith.constant 0 : index
    %4 = vector.load %arg2[%c0_5, %c0_6, %c0_7, %c0_8, %c0_9] : memref<1x1x8x16x16xf32, #tpu.memory_space<vmem>>, vector<1x1x8x16x16xf32>
    %5 = vector.shape_cast %4 : vector<1x1x8x16x16xf32> to vector<8x16x16xf32>
    %c0_10 = arith.constant 0 : index
    %c0_11 = arith.constant 0 : index
    %c0_12 = arith.constant 0 : index
    %6 = vector.load %arg4[%c0_10, %c0_11, %c0_12] : memref<8x17x17xf32, #tpu.memory_space<vmem>>, vector<8x16x16xf32>
    tpu.vector_store %arg4[%c0_10, %c0_11, %c0_12], %5 {strides = array<i32>} : memref<8x17x17xf32, #tpu.memory_space<vmem>>, vector<8x16x16xf32>,
    %c0_13 = arith.constant 0 : index
    %c0_14 = arith.constant 0 : index
    %c0_15 = arith.constant 0 : index
    %7 = tpu.strided_load %arg4[%c0_13, %c0_14, %c0_15] {strides = array<i32: 1, 2, 1>} : memref<8x17x17xf32, #tpu.memory_space<vmem>>, vector<8x8x17xf32>
    %c0_16 = arith.constant 0 : index
    %c1 = arith.constant 1 : index
    %c0_17 = arith.constant 0 : index
    %8 = tpu.strided_load %arg4[%c0_16, %c1, %c0_17] {strides = array<i32: 1, 2, 1>} : memref<8x17x17xf32, #tpu.memory_space<vmem>>, vector<8x8x17xf32>
    %9 = arith.maximumf %7, %8 : vector<8x8x17xf32>
    %c0_18 = arith.constant 0 : index
    %c2 = arith.constant 2 : index
    %c0_19 = arith.constant 0 : index
    %10 = tpu.strided_load %arg4[%c0_18, %c2, %c0_19] {strides = array<i32: 1, 2, 1>} : memref<8x17x17xf32, #tpu.memory_space<vmem>>, vector<8x8x17xf32>
    %11 = arith.maximumf %9, %10 : vector<8x8x17xf32>
    %12 = vector.extract_strided_slice %11 {offsets = [0, 0, 0], sizes = [8, 8, 15], strides = [1, 1, 1]} : vector<8x8x17xf32> to vector<8x8x15xf32>
    %13 = vector.extract_strided_slice %11 {offsets = [0, 0, 1], sizes = [8, 8, 15], strides = [1, 1, 1]} : vector<8x8x17xf32> to vector<8x8x15xf32>
    %14 = arith.maximumf %12, %13 : vector<8x8x15xf32>
    %15 = vector.extract_strided_slice %11 {offsets = [0, 0, 2], sizes = [8, 8, 15], strides = [1, 1, 1]} : vector<8x8x17xf32> to vector<8x8x15xf32>
    %16 = arith.maximumf %14, %15 : vector<8x8x15xf32>
    %c0_20 = arith.constant 0 : index
    %c0_21 = arith.constant 0 : index
    %c0_22 = arith.constant 0 : index
    %c0_23 = arith.constant 0 : index
    %c0_24 = arith.constant 0 : index
    %17 = vector.load %arg3[%c0_20, %c0_21, %c0_22, %c0_23, %c0_24] : memref<1x1x8x8x15xf32, #tpu.memory_space<vmem>>, vector<1x1x8x8x15xf32>
    %18 = vector.shape_cast %17 : vector<1x1x8x8x15xf32> to vector<8x8x15xf32>
    %19 = vector.shape_cast %16 : vector<8x8x15xf32> to vector<1x1x8x8x15xf32>
    tpu.vector_store %arg3[%c0_20, %c0_21, %c0_22, %c0_23, %c0_24], %19 {strides = array<i32>} : memref<1x1x8x8x15xf32, #tpu.memory_space<vmem>>, vector<1x1x8x8x15xf32>,
    return
  }
  func.func @transform_0(%arg0: i32, %arg1: i32) -> (i32, i32, i32, i32, i32) {
    %c0_i32 = arith.constant 0 : i32
    %c0_i32_0 = arith.constant 0 : i32
    %c0_i32_1 = arith.constant 0 : i32
    %c0_i32_2 = arith.constant 0 : i32
    return %arg0, %arg1, %c0_i32, %c0_i32_0, %c0_i32_1 : i32, i32, i32, i32, i32
  }
  func.func @transform_1(%arg0: i32, %arg1: i32) -> (i32, i32, i32, i32, i32) {
    %c0_i32 = arith.constant 0 : i32
    %c0_i32_0 = arith.constant 0 : i32
    %c0_i32_1 = arith.constant 0 : i32
    %c0_i32_2 = arith.constant 0 : i32
    return %arg0, %arg1, %c0_i32, %c0_i32_0, %c0_i32_1 : i32, i32, i32, i32, i32
  }
}

</mosaic_0001>

<llo_original>
// kernel: tpu_custom_call.1
$region0: #{tpu_custom_call.1}
  #allocation0 [shape = 'u32[]', space=smem, size = 0x4, offset = 0x4, fixed_abs, tag = 'smem constant byte address 0x4 - core index']
  #allocation1 [shape = 'u32[72,128]{1,0:T(1,128)}', space=vmem, size = 0x9000, scoped, tag = 'internal scratch']
  #allocation2 [shape = 'f32[8,17,17]{2,1,0:T(8,128)}', space=vmem, size = 0x18000, scoped, tag = 'scratch operand']
  %s0 = inlined_call_operand.hbm [shape: f32[2,4,8,16,16], index: 0, kind: input, shape index: {}]
  %s1 = inlined_call_operand.hbm [shape: f32[2,4,8,8,15], index: 1, kind: output, shape index: {}]
  %s2 = sld [smem:[#allocation0]]
  $region41: #{tpu_custom_call.1} parent=0
    _
  %s4 = ssub.s32 1, %s2
  %s5 = scalar_select 0, %s4, %s2
  $region1: #{tpu_custom_call.1} parent=0
    #allocation3 [shape = 'u8[131072]{0}', space=vmem, size = 0x20000, scoped, tag = 'input window, operand 0']
    #allocation4 [shape = 's32[2]{0}', space=sflag, size = 0x8, scoped, tag = 'scoped memory for tpu_custom_call.1']
    #allocation5 [shape = 's32[2]{0}', space=sflag, size = 0x8, scoped, tag = 'scoped memory for tpu_custom_call.1']
    #allocation6 [shape = 'u8[65536]{0}', space=vmem, size = 0x10000, scoped, tag = 'output window, operand 0']
    %6 = vsyncpa [#allocation4], 0
    %s7 = scalar_lea.sflag [#allocation4], 1
    %8 = vsyncpa %s7, 0
    %9 = vsyncpa [#allocation5], 0
    %s10 = scalar_lea.sflag [#allocation5], 1
    %11 = vsyncpa %s10, 0
    loop: start=0, step=1, limit=10
    $region2: #{tpu_custom_call.1} parent=1 // loop_pre_header
      _
    $region3: #{tpu_custom_call.1} parent=1 // loop_header
      %s13 = sphi 0, %s17
      %p14 = scmp.ge.s32.totalorder %s13, 10
      %s20 = sphi 0, %s32
      %s21 = sphi 0, %s28
      %s22 = sphi 0, %s20
      %s23 = sphi 0, %s21
      %s24 = sphi 0, %s22
      %s25 = sphi 0, %s23
      %s37 = sphi 0, %s39
      %s40 = sphi 0, %s37
      %s41 = sphi 0, %s40
      %s57 = sphi 0, %s41
      %s65 = sphi 0, %s67
      %s68 = sphi 0, %s65
      %s69 = sphi 0, %s68
      %s85 = sphi 0, %s69
    $region4: #{tpu_custom_call.1} parent=1 // loop_header_branch
      %16 = sbr.rel (%p14) target = $region8
    $region5: #{tpu_custom_call.1} parent=1 // loop_body
      %s18 = ssub.s32 %s13, 1
      %s19 = ssub.s32 %s13, 2
      %s26 = sadd.s32 1, %s21
      %p27 = scmp.ge.s32.totalorder %s26, 4
      %s28 = scalar_select %p27, 0, %s26
      %s29 = sadd.s32 1, %s20
      %s30 = scalar_select %p27, %s29, %s20
      %p31 = scmp.ge.s32.totalorder %s30, 2
      %s32 = scalar_select %p31, 0, %s30
      %s33 = ssub.s32 %s20, %s32
      %s34 = ssub.s32 %s21, %s28
      %s35 = sor.u32 %s33, %s34
      %p36 = scmp.eq.s32.totalorder %s35, 0
      %s38 = sadd.s32 %s37, 1
      %s39 = scalar_select %p36, %s37, %s38
      %p42 = pneg %p36
      %p43 = scmp.eq.s32.totalorder %s13, 7
      %p44 = por %p42, %p43
      %p45 = scmp.ne.s32.totalorder %s37, %s40
      %p46 = scmp.eq.s32.totalorder %s13, 0
      %p47 = por %p45, %p46
      %p48 = scmp.ne.s32.totalorder %s37, %s40
      %p49 = scmp.eq.s32.totalorder %s18, 7
      %p50 = por %p48, %p49
      %p51 = scmp.ne.s32.totalorder %s40, %s41
      %p52 = scmp.eq.s32.totalorder %s18, 0
      %p53 = por %p51, %p52
      %p54 = scmp.ne.s32.totalorder %s40, %s41
      %p55 = scmp.eq.s32.totalorder %s19, 7
      %p56 = por %p54, %p55
      %p58 = scmp.ne.s32.totalorder %s41, %s57
      %p59 = scmp.eq.s32.totalorder %s19, 0
      %p60 = por %p58, %p59
      %s61 = ssub.s32 %s20, %s32
      %s62 = ssub.s32 %s21, %s28
      %s63 = sor.u32 %s61, %s62
      %p64 = scmp.eq.s32.totalorder %s63, 0
      %s66 = sadd.s32 %s65, 1
      %s67 = scalar_select %p64, %s65, %s66
      %p70 = pneg %p64
      %p71 = scmp.eq.s32.totalorder %s13, 7
      %p72 = por %p70, %p71
      %p73 = scmp.ne.s32.totalorder %s65, %s68
      %p74 = scmp.eq.s32.totalorder %s13, 0
      %p75 = por %p73, %p74
      %p76 = scmp.ne.s32.totalorder %s65, %s68
      %p77 = scmp.eq.s32.totalorder %s18, 7
      %p78 = por %p76, %p77
      %p79 = scmp.ne.s32.totalorder %s68, %s69
      %p80 = scmp.eq.s32.totalorder %s18, 0
      %p81 = por %p79, %p80
      %p82 = scmp.ne.s32.totalorder %s68, %s69
      %p83 = scmp.eq.s32.totalorder %s19, 7
      %p84 = por %p82, %p83
      %p86 = scmp.ne.s32.totalorder %s69, %s85
      %p87 = scmp.eq.s32.totalorder %s19, 0
      %p88 = por %p86, %p87
      %p89 = scmp.le.s32.totalorder 1, %s13
      %p90 = scmp.lt.s32.totalorder %s13, 9
      %p91 = pnand %p89, %p90
      %p92 = pneg %p91
      // Predicated region
      $region9: #{tpu_custom_call.1} parent=5 // pred_check
        _
      $region10: #{tpu_custom_call.1} parent=5 // pred_check_branch
        %94 = sbr.rel (%p91) target = $region12
      $region11: #{tpu_custom_call.1} parent=5 // pred_region
        %s95 = ssub.s32 %s13, 1
      $region12: #{tpu_custom_call.1} parent=5 // pred_fallthru
        _
      %p96 = scmp.lt.s32.totalorder %s13, 8
      // Predicated region
      $region13: #{tpu_custom_call.1} parent=5 // pred_check
        %p97 = pneg %p96
      $region14: #{tpu_custom_call.1} parent=5 // pred_check_branch
        %99 = sbr.rel (%p97) target = $region16
      $region15: #{tpu_custom_call.1} parent=5 // pred_region
        // Predicated region
        $region17: #{tpu_custom_call.1} parent=15 // pred_check
          %p100 = pneg %p47
        $region18: #{tpu_custom_call.1} parent=15 // pred_check_branch
          %102 = sbr.rel (%p100) target = $region20
        $region19: #{tpu_custom_call.1} parent=15 // pred_region
          %s103 = sand.u32 %s37, 1
          %s104 = scalar_lea.sflag [#allocation4], %s103
          %s105 = sand.u32 %s37, 1
          %s106 = smul.addr %s105, 128
          %s107 = scalar_lea.vmem [#allocation3], %s106
          %109 = vsyncadd %s104, 0
          %s110 = smul.addr %s21, 16
          %s111 = smul.addr %s20, 64
          %s112 = sadd.s32 %s110, %s111
          %s113 = smul.addr %s112, 8
          %s114 = scalar_lea.hbm %s0, %s113
          %s115 = sshll.u32 %s114, 4
          %s116 = int_to_ptr.hbm [resolvable:$true] %s115
          %s117 = sshll.u32 %s107, 4
          %s118 = int_to_ptr.vmem [resolvable:$true] %s117
          %123 = dma.hbm_to_vmem [thread:$0]  %s116, 2048, %s118, %s104, 128, 128, 8
        $region20: #{tpu_custom_call.1} parent=15 // pred_fallthru
          _
      $region16: #{tpu_custom_call.1} parent=5 // pred_fallthru
        _
      %p124 = scmp.le.s32.totalorder 1, %s13
      %p125 = scmp.lt.s32.totalorder %s13, 9
      %p126 = pnand %p124, %p125
      %p127 = pneg %p126
      // Predicated region
      $region21: #{tpu_custom_call.1} parent=5 // pred_check
        _
      $region22: #{tpu_custom_call.1} parent=5 // pred_check_branch
        %129 = sbr.rel (%p126) target = $region24
      $region23: #{tpu_custom_call.1} parent=5 // pred_region
        %s130 = ssub.s32 %s13, 1
        %s131 = sand.u32 %s40, 1
        %s132 = scalar_lea.sflag [#allocation4], %s131
        %s133 = sand.u32 %s40, 1
        %s134 = smul.addr %s133, 128
        %s135 = scalar_lea.vmem [#allocation3], %s134
        // Predicated region
        $region25: #{tpu_custom_call.1} parent=23 // pred_check
          %p136 = pneg %p53
        $region26: #{tpu_custom_call.1} parent=23 // pred_check_branch
          %138 = sbr.rel (%p136) target = $region28
        $region27: #{tpu_custom_call.1} parent=23 // pred_region
          %140 = dma.done %s132, 2048
        $region28: #{tpu_custom_call.1} parent=23 // pred_fallthru
          _
        %s141 = sand.u32 %s40, 1
        %s142 = scalar_lea.sflag [#allocation4], %s141
        %s143 = sand.u32 %s40, 1
        %s144 = smul.addr %s143, 128
        %s145 = scalar_lea.vmem [#allocation3], %s144
        %p146 = pneg %p53
        %p147 = pneg %p50
        %p148 = pneg %p81
        %p149 = pneg %p78
        %s150 = sand.u32 %s68, 1
        %s151 = scalar_lea.sflag [#allocation5], %s150
        %s152 = sand.u32 %s68, 1
        %s153 = smul.addr %s152, 64
        %s154 = scalar_lea.vmem [#allocation6], %s153
        %vm155 = vcmask 131072
        %156 = vst.msk [vmem:[#allocation2 + $0x10] sm:$0x1] %vm155, 0.0
        %157 = vst.msk [vmem:[#allocation2 + $0x28] sm:$0x1] %vm155, 0.0
        %158 = vst.msk [vmem:[#allocation2 + $0x40] sm:$0x1] %vm155, 0.0
        %159 = vst.msk [vmem:[#allocation2 + $0x58] sm:$0x1] %vm155, 0.0
        %160 = vst.msk [vmem:[#allocation2 + $0x70] sm:$0x1] %vm155, 0.0
        %161 = vst.msk [vmem:[#allocation2 + $0x88] sm:$0x1] %vm155, 0.0
        %162 = vst.msk [vmem:[#allocation2 + $0xa0] sm:$0x1] %vm155, 0.0
        %163 = vst.msk [vmem:[#allocation2 + $0xb8] sm:$0x1] %vm155, 0.0
        %vm164 = vcmask 138368
        %165 = vst.msk [vmem:[#allocation2] sm:$0xff] %vm164, 0.0
        %166 = vst.msk [vmem:[#allocation2 + $0x8] sm:$0xff] %vm164, 0.0
        %vm167 = vcmask 131200
        %168 = vst.msk [vmem:[#allocation2 + $0x10] sm:$0x1] %vm167, 0.0
        %169 = vst.msk [vmem:[#allocation2 + $0x18] sm:$0xff] %vm164, 0.0
        %170 = vst.msk [vmem:[#allocation2 + $0x20] sm:$0xff] %vm164, 0.0
        %171 = vst.msk [vmem:[#allocation2 + $0x28] sm:$0x1] %vm167, 0.0
        %172 = vst.msk [vmem:[#allocation2 + $0x30] sm:$0xff] %vm164, 0.0
        %173 = vst.msk [vmem:[#allocation2 + $0x38] sm:$0xff] %vm164, 0.0
        %174 = vst.msk [vmem:[#allocation2 + $0x40] sm:$0x1] %vm167, 0.0
        %175 = vst.msk [vmem:[#allocation2 + $0x48] sm:$0xff] %vm164, 0.0
        %176 = vst.msk [vmem:[#allocation2 + $0x50] sm:$0xff] %vm164, 0.0
        %177 = vst.msk [vmem:[#allocation2 + $0x58] sm:$0x1] %vm167, 0.0
        %178 = vst.msk [vmem:[#allocation2 + $0x60] sm:$0xff] %vm164, 0.0
        %179 = vst.msk [vmem:[#allocation2 + $0x68] sm:$0xff] %vm164, 0.0
        %180 = vst.msk [vmem:[#allocation2 + $0x70] sm:$0x1] %vm167, 0.0
        %181 = vst.msk [vmem:[#allocation2 + $0x78] sm:$0xff] %vm164, 0.0
        %182 = vst.msk [vmem:[#allocation2 + $0x80] sm:$0xff] %vm164, 0.0
        %183 = vst.msk [vmem:[#allocation2 + $0x88] sm:$0x1] %vm167, 0.0
        %184 = vst.msk [vmem:[#allocation2 + $0x90] sm:$0xff] %vm164, 0.0
        %185 = vst.msk [vmem:[#allocation2 + $0x98] sm:$0xff] %vm164, 0.0
        %186 = vst.msk [vmem:[#allocation2 + $0xa0] sm:$0x1] %vm167, 0.0
        %187 = vst.msk [vmem:[#allocation2 + $0xa8] sm:$0xff] %vm164, 0.0
        %188 = vst.msk [vmem:[#allocation2 + $0xb0] sm:$0xff] %vm164, 0.0
        %189 = vst.msk [vmem:[#allocation2 + $0xb8] sm:$0x1] %vm167, 0.0
        %v190 = vld [vmem:[%s135] sm:$0xff]
        %v191 = vld [vmem:[%s135 + $0x8] sm:$0xff]
        %v192 = vld [vmem:[%s135 + $0x10] sm:$0xff]
        %v193 = vld [vmem:[%s135 + $0x18] sm:$0xff]
        %v194 = vld [vmem:[%s135 + $0x20] sm:$0xff]
        %v195 = vld [vmem:[%s135 + $0x28] sm:$0xff]
        %v196 = vld [vmem:[%s135 + $0x30] sm:$0xff]
        %v197 = vld [vmem:[%s135 + $0x38] sm:$0xff]
        %v198 = vld [vmem:[%s135 + $0x40] sm:$0xff]
        %v199 = vld [vmem:[%s135 + $0x48] sm:$0xff]
        %v200 = vld [vmem:[%s135 + $0x50] sm:$0xff]
        %v201 = vld [vmem:[%s135 + $0x58] sm:$0xff]
        %v202 = vld [vmem:[%s135 + $0x60] sm:$0xff]
        %v203 = vld [vmem:[%s135 + $0x68] sm:$0xff]
        %v204 = vld [vmem:[%s135 + $0x70] sm:$0xff]
        %v205 = vld [vmem:[%s135 + $0x78] sm:$0xff]
        %vm206 = vcmask 130048
        %207 = vst.msk [vmem:[#allocation2] sm:$0xff] %vm206, %v190
        %208 = vst.msk [vmem:[#allocation2 + $0x8] sm:$0xff] %vm206, %v191
        %209 = vst.msk [vmem:[#allocation2 + $0x18] sm:$0xff] %vm206, %v192
        %210 = vst.msk [vmem:[#allocation2 + $0x20] sm:$0xff] %vm206, %v193
        %211 = vst.msk [vmem:[#allocation2 + $0x30] sm:$0xff] %vm206, %v194
        %212 = vst.msk [vmem:[#allocation2 + $0x38] sm:$0xff] %vm206, %v195
        %213 = vst.msk [vmem:[#allocation2 + $0x48] sm:$0xff] %vm206, %v196
        %214 = vst.msk [vmem:[#allocation2 + $0x50] sm:$0xff] %vm206, %v197
        %215 = vst.msk [vmem:[#allocation2 + $0x60] sm:$0xff] %vm206, %v198
        %216 = vst.msk [vmem:[#allocation2 + $0x68] sm:$0xff] %vm206, %v199
        %217 = vst.msk [vmem:[#allocation2 + $0x78] sm:$0xff] %vm206, %v200
        %218 = vst.msk [vmem:[#allocation2 + $0x80] sm:$0xff] %vm206, %v201
        %219 = vst.msk [vmem:[#allocation2 + $0x90] sm:$0xff] %vm206, %v202
        %220 = vst.msk [vmem:[#allocation2 + $0x98] sm:$0xff] %vm206, %v203
        %221 = vst.msk [vmem:[#allocation2 + $0xa8] sm:$0xff] %vm206, %v204
        %222 = vst.msk [vmem:[#allocation2 + $0xb0] sm:$0xff] %vm206, %v205
        %v223 = vld [vmem:[#allocation2] ss:$2 sm:$0xff]
        %s224 = scalar_lea.vmem [#allocation2], 24
        %v225 = vld [vmem:[%s224] ss:$2 sm:$0xff]
        %s226 = scalar_lea.vmem [#allocation2], 48
        %v227 = vld [vmem:[%s226] ss:$2 sm:$0xff]
        %s228 = scalar_lea.vmem [#allocation2], 72
        %v229 = vld [vmem:[%s228] ss:$2 sm:$0xff]
        %s230 = scalar_lea.vmem [#allocation2], 96
        %v231 = vld [vmem:[%s230] ss:$2 sm:$0xff]
        %s232 = scalar_lea.vmem [#allocation2], 120
        %v233 = vld [vmem:[%s232] ss:$2 sm:$0xff]
        %s234 = scalar_lea.vmem [#allocation2], 144
        %v235 = vld [vmem:[%s234] ss:$2 sm:$0xff]
        %s236 = scalar_lea.vmem [#allocation2], 168
        %v237 = vld [vmem:[%s236] ss:$2 sm:$0xff]
        %s238 = scalar_lea.vmem [#allocation2], 1
        %v239 = vld [vmem:[%s238] ss:$2 sm:$0xff]
        %s240 = scalar_lea.vmem [#allocation2], 25
        %v241 = vld [vmem:[%s240] ss:$2 sm:$0xff]
        %s242 = scalar_lea.vmem [#allocation2], 49
        %v243 = vld [vmem:[%s242] ss:$2 sm:$0xff]
        %s244 = scalar_lea.vmem [#allocation2], 73
        %v245 = vld [vmem:[%s244] ss:$2 sm:$0xff]
        %s246 = scalar_lea.vmem [#allocation2], 97
        %v247 = vld [vmem:[%s246] ss:$2 sm:$0xff]
        %s248 = scalar_lea.vmem [#allocation2], 121
        %v249 = vld [vmem:[%s248] ss:$2 sm:$0xff]
        %s250 = scalar_lea.vmem [#allocation2], 145
        %v251 = vld [vmem:[%s250] ss:$2 sm:$0xff]
        %s252 = scalar_lea.vmem [#allocation2], 169
        %v253 = vld [vmem:[%s252] ss:$2 sm:$0xff]
        %v254 = vmax.f32 %v223, %v239
        %v255 = vmax.f32 %v225, %v241
        %v256 = vmax.f32 %v227, %v243
        %v257 = vmax.f32 %v229, %v245
        %v258 = vmax.f32 %v231, %v247
        %v259 = vmax.f32 %v233, %v249
        %v260 = vmax.f32 %v235, %v251
        %v261 = vmax.f32 %v237, %v253
        %s262 = scalar_lea.vmem [#allocation2], 2
        %v263 = vld [vmem:[%s262] ss:$2 sm:$0xff]
        %s264 = scalar_lea.vmem [#allocation2], 26
        %v265 = vld [vmem:[%s264] ss:$2 sm:$0xff]
        %s266 = scalar_lea.vmem [#allocation2], 50
        %v267 = vld [vmem:[%s266] ss:$2 sm:$0xff]
        %s268 = scalar_lea.vmem [#allocation2], 74
        %v269 = vld [vmem:[%s268] ss:$2 sm:$0xff]
        %s270 = scalar_lea.vmem [#allocation2], 98
        %v271 = vld [vmem:[%s270] ss:$2 sm:$0xff]
        %s272 = scalar_lea.vmem [#allocation2], 122
        %v273 = vld [vmem:[%s272] ss:$2 sm:$0xff]
        %s274 = scalar_lea.vmem [#allocation2], 146
        %v275 = vld [vmem:[%s274] ss:$2 sm:$0xff]
        %s276 = scalar_lea.vmem [#allocation2], 170
        %v277 = vld [vmem:[%s276] ss:$2 sm:$0xff]
        %v278 = vmax.f32 %v254, %v263
        %v279 = vmax.f32 %v255, %v265
        %v280 = vmax.f32 %v256, %v267
        %v281 = vmax.f32 %v257, %v269
        %v282 = vmax.f32 %v258, %v271
        %v283 = vmax.f32 %v259, %v273
        %v284 = vmax.f32 %v260, %v275
        %v285 = vmax.f32 %v261, %v277
        %294 = vrot.lane.b32.xlu0 %v278, 127
        %v295 = vpop.permute.xlu0 %294
        %296 = vrot.lane.b32.xlu0 %v279, 127
        %v297 = vpop.permute.xlu0 %296
        %298 = vrot.lane.b32.xlu0 %v280, 127
        %v299 = vpop.permute.xlu0 %298
        %300 = vrot.lane.b32.xlu0 %v281, 127
        %v301 = vpop.permute.xlu0 %300
        %302 = vrot.lane.b32.xlu0 %v282, 127
        %v303 = vpop.permute.xlu0 %302
        %304 = vrot.lane.b32.xlu0 %v283, 127
        %v305 = vpop.permute.xlu0 %304
        %306 = vrot.lane.b32.xlu0 %v284, 127
        %v307 = vpop.permute.xlu0 %306
        %308 = vrot.lane.b32.xlu0 %v285, 127
        %v309 = vpop.permute.xlu0 %308
        %v318 = vmax.f32 %v278, %v295
        %v319 = vmax.f32 %v279, %v297
        %v320 = vmax.f32 %v280, %v299
        %v321 = vmax.f32 %v281, %v301
        %v322 = vmax.f32 %v282, %v303
        %v323 = vmax.f32 %v283, %v305
        %v324 = vmax.f32 %v284, %v307
        %v325 = vmax.f32 %v285, %v309
        %326 = vrot.lane.b32.xlu0 %v278, 126
        %v327 = vpop.permute.xlu0 %326
        %328 = vrot.lane.b32.xlu0 %v279, 126
        %v329 = vpop.permute.xlu0 %328
        %330 = vrot.lane.b32.xlu0 %v280, 126
        %v331 = vpop.permute.xlu0 %330
        %332 = vrot.lane.b32.xlu0 %v281, 126
        %v333 = vpop.permute.xlu0 %332
        %334 = vrot.lane.b32.xlu0 %v282, 126
        %v335 = vpop.permute.xlu0 %334
        %336 = vrot.lane.b32.xlu0 %v283, 126
        %v337 = vpop.permute.xlu0 %336
        %338 = vrot.lane.b32.xlu0 %v284, 126
        %v339 = vpop.permute.xlu0 %338
        %340 = vrot.lane.b32.xlu0 %v285, 126
        %v341 = vpop.permute.xlu0 %340
        %v350 = vmax.f32 %v318, %v327
        %v351 = vmax.f32 %v319, %v329
        %v352 = vmax.f32 %v320, %v331
        %v353 = vmax.f32 %v321, %v333
        %v354 = vmax.f32 %v322, %v335
        %v355 = vmax.f32 %v323, %v337
        %v356 = vmax.f32 %v324, %v339
        %v357 = vmax.f32 %v325, %v341
        %vm358 = vcmask 121856
        %359 = vst.msk [vmem:[%s154] sm:$0xff] %vm358, %v350
        %360 = vst.msk [vmem:[%s154 + $0x8] sm:$0xff] %vm358, %v351
        %361 = vst.msk [vmem:[%s154 + $0x10] sm:$0xff] %vm358, %v352
        %362 = vst.msk [vmem:[%s154 + $0x18] sm:$0xff] %vm358, %v353
        %363 = vst.msk [vmem:[%s154 + $0x20] sm:$0xff] %vm358, %v354
        %364 = vst.msk [vmem:[%s154 + $0x28] sm:$0xff] %vm358, %v355
        %365 = vst.msk [vmem:[%s154 + $0x30] sm:$0xff] %vm358, %v356
        %366 = vst.msk [vmem:[%s154 + $0x38] sm:$0xff] %vm358, %v357
        %s367 = sand.u32 %s68, 1
        %s368 = scalar_lea.sflag [#allocation5], %s367
        %s369 = sand.u32 %s68, 1
        %s370 = smul.addr %s369, 64
        %s371 = scalar_lea.vmem [#allocation6], %s370
        // Predicated region
        $region29: #{tpu_custom_call.1} parent=23 // pred_check
          %p372 = pneg %p78
        $region30: #{tpu_custom_call.1} parent=23 // pred_check_branch
          %374 = sbr.rel (%p372) target = $region32
        $region31: #{tpu_custom_call.1} parent=23 // pred_region
          %376 = vsyncadd %s368, 0
          %s377 = smul.addr %s23, 8
          %s378 = smul.addr %s22, 32
          %s379 = sadd.s32 %s377, %s378
          %s380 = smul.addr %s379, 8
          %s381 = scalar_lea.hbm %s1, %s380
          %s382 = sshll.u32 %s371, 4
          %s383 = int_to_ptr.vmem [resolvable:$true] %s382
          %s384 = sshll.u32 %s381, 4
          %s385 = int_to_ptr.hbm [resolvable:$true] %s384
          %390 = dma.vmem_to_hbm [thread:$0]  %s383, 1024, %s385, %s368, 128, 128, 8
        $region32: #{tpu_custom_call.1} parent=23 // pred_fallthru
          _
      $region24: #{tpu_custom_call.1} parent=5 // pred_fallthru
        _
      %p391 = scmp.le.s32.totalorder 2, %s13
      // Predicated region
      $region33: #{tpu_custom_call.1} parent=5 // pred_check
        %p392 = pneg %p391
      $region34: #{tpu_custom_call.1} parent=5 // pred_check_branch
        %394 = sbr.rel (%p392) target = $region36
      $region35: #{tpu_custom_call.1} parent=5 // pred_region
        %s395 = ssub.s32 %s13, 2
        // Predicated region
        $region37: #{tpu_custom_call.1} parent=35 // pred_check
          %p396 = pneg %p84
        $region38: #{tpu_custom_call.1} parent=35 // pred_check_branch
          %398 = sbr.rel (%p396) target = $region40
        $region39: #{tpu_custom_call.1} parent=35 // pred_region
          %s399 = sand.u32 %s69, 1
          %s400 = scalar_lea.sflag [#allocation5], %s399
          %s401 = sand.u32 %s69, 1
          %s402 = smul.addr %s401, 64
          %s403 = scalar_lea.vmem [#allocation6], %s402
          %405 = dma.done %s400, 1024
        $region40: #{tpu_custom_call.1} parent=35 // pred_fallthru
          _
      $region36: #{tpu_custom_call.1} parent=5 // pred_fallthru
        _
    $region6: #{tpu_custom_call.1} parent=1 // loop_footer
      %s17 = sadd.s32 1, %s13
    $region7: #{tpu_custom_call.1} parent=1 // loop_footer_branch
      %12 = sbr.rel target = $region3
    $region8: #{tpu_custom_call.1} parent=1 // loop_exit
      _
    %406 = vsyncpa [#allocation4], 1
    %s407 = scalar_lea.sflag [#allocation4], 1
    %408 = vsyncpa %s407, 1
    %409 = vsyncpa [#allocation5], 1
    %s410 = scalar_lea.sflag [#allocation5], 1
    %411 = vsyncpa %s410, 1

</llo_original>
